<compile_context>
chip_gen: v6e
topology: v6e:2x2x1
jax: 0.10.0
libtpu: 0.0.40
codegen_flags: <defaults>
</compile_context>

<pallas_src>
import math

import numpy as np
import jax
import jax.numpy as jnp
from jax.experimental import pallas as pl
from jax.experimental.pallas import tpu as pltpu

_LANES = 128
_MIN_PALLAS_ELEMS = 128 * 1024   # below this, fused XLA beats kernel launch + layout copies
_TM_MAX = 4096                   # 2 MiB/block f32; in+out double-buffered ~8 MiB < v5e 16 MiB default


def _mixture_logprob_kernel(loc_ref, isc_ref, bias_ref, x_ref, out_ref):
    """out[r, l] = logsumexp_k( -((x[r,l]-loc[k])*isc[k])^2 + bias[k] ).

    loc_ref / isc_ref / bias_ref : SMEM f32[K]  (per-component scalars)
    x_ref / out_ref              : VMEM f32[TM, 128]  (lane-dense tiles)
    isc[k] = 1/(scale[k]*sqrt(2)) (0.5 pre-folded); bias[k] folds in
    -log(scale[k]) - 0.5*log(2*pi) - log(K) (log K dropped when K collapsed to 1).
    """
    x = x_ref[...]
    K = loc_ref.shape[0]

    def lp(k):
        d = (x - loc_ref[k]) * isc_ref[k]
        return bias_ref[k] - d * d

    m = lp(0)
    if K == 1:
        # Identical-component fast path: single Normal log-prob, no logsumexp.
        out_ref[...] = m
        return

    # Online logsumexp over the K mixture components, statically unrolled (K small &
    # static). Two-exp form: both exps land in the EUP bundle slot (idle), while the
    # saturated VALU slots shed the abs/compare/select of the one-exp variant.
    s = jnp.ones_like(x)
    for k in range(1, K):
        l = lp(k)
        new_m = jnp.maximum(m, l)
        s = s * jnp.exp(m - new_m) + jnp.exp(l - new_m)
        m = new_m
    out_ref[...] = m + jnp.log(s)


def _mixture_logprob_xla(x, loc, scale):
    """Fused XLA path for small inputs (kernel overhead would dominate)."""
    K = loc.shape[0]
    lp = (-0.5 * jnp.square((x[..., None] - loc) / scale)
          - jnp.log(scale)
          - 0.5 * jnp.float32(math.log(2.0 * math.pi)))
    return jax.scipy.special.logsumexp(lp, axis=-1) - jnp.log(jnp.float32(K))


def _concrete_constant_component(loc, scale):
    """If loc/scale are concrete and all components identical, return (loc0, scale0)."""
    try:
        loc_np = np.asarray(loc)
        scale_np = np.asarray(scale)
    except Exception:  # tracers / abstract values -> cannot decide, use general path
        return None
    if loc_np.size == 0 or scale_np.size == 0:
        return None
    if np.all(loc_np == loc_np.flat[0]) and np.all(scale_np == scale_np.flat[0]):
        return float(loc_np.flat[0]), float(scale_np.flat[0])
    return None


def mixture_logprob_pallas(x, loc, scale, *, min_pallas_elems=_MIN_PALLAS_ELEMS):
    """prior.log_prob(x) of the uniform mixture of Normal(loc[k], scale[k]).

    x: (M, D) -> returns (M, D) float32.
    """
    M, D = x.shape
    K = loc.shape[0]
    x = x.astype(jnp.float32)
    loc = loc.astype(jnp.float32)
    scale = scale.astype(jnp.float32)

    total = M * D
    if total < min_pallas_elems:
        return _mixture_logprob_xla(x, loc, scale)

    # Collapse identical components: logsumexp of K identical terms = term + log K,
    # which exactly cancels the -log K mixture weight.
    const = _concrete_constant_component(loc, scale)
    if const is not None:
        loc_v = jnp.full((1,), const[0], jnp.float32)
        scale_v = jnp.full((1,), const[1], jnp.float32)
        log_k = 0.0
    else:
        loc_v, scale_v = loc, scale
        log_k = math.log(K)

    # Fold the 0.5 into the scale:  -0.5*((x-loc)/scale)^2 == -((x-loc)*inv_scale)^2
    inv_scale = (1.0 / (scale_v * jnp.float32(math.sqrt(2.0)))).astype(jnp.float32)
    bias = (-jnp.log(scale_v)
            - jnp.float32(0.5 * math.log(2.0 * math.pi))
            - jnp.float32(log_k)).astype(jnp.float32)

    # Lane-dense layout: flatten (M, D) -> (rows8, 128), padding only to a multiple of
    # 8 rows (not of TM); Pallas handles the ragged last grid block itself.
    rows = pl.cdiv(total, _LANES)
    rows8 = ((rows + 7) // 8) * 8
    padded_total = rows8 * _LANES

    x_flat = jnp.ravel(x)
    if padded_total > total:
        x_flat = jnp.pad(x_flat, (0, padded_total - total))
    x2 = x_flat.reshape(rows8, _LANES)

    # Row tile: big enough to amortize per-step overhead, but split into >= 2 blocks
    # whenever possible so ("parallel",) shards across both v7x TensorCores.
    half = ((pl.cdiv(rows8, 2) + 7) // 8) * 8
    TM = max(8, min(_TM_MAX, half))
    n_blocks = pl.cdiv(rows8, TM)

    out2 = pl.pallas_call(
        _mixture_logprob_kernel,
        out_shape=jax.ShapeDtypeStruct((rows8, _LANES), jnp.float32),
        grid=(n_blocks,),
        in_specs=[
            pl.BlockSpec(memory_space=pltpu.MemorySpace.SMEM),   # loc
            pl.BlockSpec(memory_space=pltpu.MemorySpace.SMEM),   # 1/(scale*sqrt(2))
            pl.BlockSpec(memory_space=pltpu.MemorySpace.SMEM),   # bias
            pl.BlockSpec((TM, _LANES), lambda i: (i, 0)),        # x tile
        ],
        out_specs=pl.BlockSpec((TM, _LANES), lambda i: (i, 0)),
        compiler_params=pltpu.CompilerParams(
            dimension_semantics=("parallel",)),
    )(loc_v, inv_scale, bias, x2)

    if padded_total == total:
        return out2.reshape(M, D)          # no extra HBM pass when already aligned
    return out2.reshape(-1)[:total].reshape(M, D)


class NormalizingFlowModelMVNPallas:
    """JAX/Pallas port of NormalizingFlowModelMVN (forward pass only)."""

    def __init__(self, rep_sample, flows, loc, scale, dim):
        # Matches torch __init__: loc/scale are scalar offsets broadcast to (dim,)
        self._rep_sample = rep_sample
        self.flows = tuple(flows)            # empty: no flow classes were provided
        self.dim = dim
        self.loc = jnp.zeros((dim,), jnp.float32) + jnp.float32(loc)
        self.scale = jnp.zeros((dim,), jnp.float32) + jnp.float32(scale)

    def forward(self, x, context=None):
        m, _dim = x.shape
        log_det = jnp.zeros((m,), jnp.float32)
        for flow in self.flows:              # empty -> identity / zero log-det
            x, ld = flow(x, context=context)
            log_det = log_det + ld
        z = x
        prior_logprob = mixture_logprob_pallas(x, self.loc, self.scale)
        return z, prior_logprob, log_det


def _mixture_logprob_reference(x, loc, scale):
    """Pure-JAX reference matching torch MixtureSameFamily.log_prob semantics."""
    K = loc.shape[0]
    lp = (-0.5 * ((x[..., None] - loc) / scale) ** 2
          - jnp.log(scale) - 0.5 * jnp.log(2.0 * jnp.pi))
    return jax.scipy.special.logsumexp(lp - jnp.log(jnp.float32(K)), axis=-1)


if __name__ == "__main__":
    key = jax.random.PRNGKey(0)
    m, dim = 256, 16                          # x shape (m, dim) per forward()
    kx, kl, ks = jax.random.split(key, 3)
    x = jax.random.normal(kx, (m, dim), dtype=jnp.float32)

    model = NormalizingFlowModelMVNPallas(rep_sample=True, flows=(),
                                          loc=0.3, scale=1.2, dim=dim)

    # Model forward at demo scale (4096 elems) takes the fused-XLA path (cheaper than
    # a kernel launch); numerics must still match the reference.
    z, prior_logprob, log_det = model.forward(x)
    jax.block_until_ready((z, prior_logprob, log_det))

    lp_ref = _mixture_logprob_reference(x, model.loc, model.scale)
    assert z.shape == (m, dim) and prior_logprob.shape == (m, dim) and log_det.shape == (m,)
    assert jnp.allclose(z, x, atol=1e-6)
    assert jnp.allclose(prior_logprob, lp_ref, atol=1e-5, rtol=1e-5)
    assert jnp.allclose(log_det, jnp.zeros((m,), jnp.float32))

    # Explicitly exercise the Pallas kernel at small shapes (force past the XLA cutoff):
    # (a) identical-component fast path (K collapsed to 1).
    lp_k1 = mixture_logprob_pallas(x, model.loc, model.scale, min_pallas_elems=0)
    jax.block_until_ready(lp_k1)
    assert jnp.allclose(lp_k1, lp_ref, atol=1e-5, rtol=1e-5)

    # (b) general K-component path (non-identical loc/scale), two-exp online logsumexp.
    loc_g = jax.random.normal(kl, (dim,), dtype=jnp.float32)
    scale_g = 0.5 + jax.nn.softplus(jax.random.normal(ks, (dim,), dtype=jnp.float32))
    lp_gen = mixture_logprob_pallas(x, loc_g, scale_g, min_pallas_elems=0)
    jax.block_until_ready(lp_gen)
    lp_gen_ref = _mixture_logprob_reference(x, loc_g, scale_g)
    assert jnp.allclose(lp_gen, lp_gen_ref, atol=1e-5, rtol=1e-5)

    print("KERNEL_OK")
</pallas_src>

<mosaic_0001>
module attributes {stable_mosaic.version = 11 : i64} {
  func.func @_mixture_logprob_kernel(%arg0: i32, %arg1: memref<1xf32, #tpu.memory_space<smem>>, %arg2: memref<1xf32, #tpu.memory_space<smem>>, %arg3: memref<1xf32, #tpu.memory_space<smem>>, %arg4: memref<16x128xf32, #tpu.memory_space<vmem>>, %arg5: memref<16x128xf32, #tpu.memory_space<vmem>>) attributes {dimension_semantics = [#tpu.dimension_semantics<parallel>], iteration_bounds = array<i64: 2>, scalar_prefetch = 0 : i64, scratch_operands = 0 : i64, tpu.core_type = #tpu.core_type<tc>, window_params = [{transform_indices = @transform_0, window_bounds = array<i64: 1>}, {transform_indices = @transform_1, window_bounds = array<i64: 1>}, {transform_indices = @transform_2, window_bounds = array<i64: 1>}, {transform_indices = @transform_3, window_bounds = array<i64: 16, 128>}, {transform_indices = @transform_4, window_bounds = array<i64: 16, 128>}]} {
    %c0 = arith.constant 0 : index
    %c0_0 = arith.constant 0 : index
    %0 = vector.load %arg4[%c0, %c0_0] : memref<16x128xf32, #tpu.memory_space<vmem>>, vector<16x128xf32>
    %c0_1 = arith.constant 0 : index
    %1 = memref.load %arg1[%c0_1] : memref<1xf32, #tpu.memory_space<smem>>
    %2 = vector.broadcast %1 : f32 to vector<16x128xf32>
    %3 = arith.subf %0, %2 : vector<16x128xf32>
    %c0_2 = arith.constant 0 : index
    %4 = memref.load %arg2[%c0_2] : memref<1xf32, #tpu.memory_space<smem>>
    %5 = vector.broadcast %4 : f32 to vector<16x128xf32>
    %6 = arith.mulf %3, %5 : vector<16x128xf32>
    %c0_3 = arith.constant 0 : index
    %7 = memref.load %arg3[%c0_3] : memref<1xf32, #tpu.memory_space<smem>>
    %8 = arith.mulf %6, %6 : vector<16x128xf32>
    %9 = vector.broadcast %7 : f32 to vector<16x128xf32>
    %10 = arith.subf %9, %8 : vector<16x128xf32>
    %c0_4 = arith.constant 0 : index
    %c0_5 = arith.constant 0 : index
    %11 = vector.load %arg5[%c0_4, %c0_5] : memref<16x128xf32, #tpu.memory_space<vmem>>, vector<16x128xf32>
    tpu.vector_store %arg5[%c0_4, %c0_5], %10 {strides = array<i32>} : memref<16x128xf32, #tpu.memory_space<vmem>>, vector<16x128xf32>,
    return
  }
  func.func @transform_0(%arg0: i32) -> i32 {
    %c0_i32 = arith.constant 0 : i32
    %c0_i32_0 = arith.constant 0 : i32
    return %c0_i32 : i32
  }
  func.func @transform_1(%arg0: i32) -> i32 {
    %c0_i32 = arith.constant 0 : i32
    %c0_i32_0 = arith.constant 0 : i32
    return %c0_i32 : i32
  }
  func.func @transform_2(%arg0: i32) -> i32 {
    %c0_i32 = arith.constant 0 : i32
    %c0_i32_0 = arith.constant 0 : i32
    return %c0_i32 : i32
  }
  func.func @transform_3(%arg0: i32) -> (i32, i32) {
    %c0_i32 = arith.constant 0 : i32
    %c0_i32_0 = arith.constant 0 : i32
    return %arg0, %c0_i32 : i32, i32
  }
  func.func @transform_4(%arg0: i32) -> (i32, i32) {
    %c0_i32 = arith.constant 0 : i32
    %c0_i32_0 = arith.constant 0 : i32
    return %arg0, %c0_i32 : i32, i32
  }
}

</mosaic_0001>

<llo_original>
// kernel: tpu_custom_call.1
$region0: #{tpu_custom_call.1}
  #allocation0 [shape = 'u32[]', space=smem, size = 0x4, offset = 0x4, fixed_abs, tag = 'smem constant byte address 0x4 - core index']
  #allocation1 [shape = 'u32[144,128]{1,0:T(1,128)}', space=vmem, size = 0x12000, scoped, tag = 'internal scratch']
  #allocation2 [shape = 'f32[1]{0:T(128)S(6)}', space=smem, size = 0x200, scoped, tag = 'scoped memory for tpu_custom_call.1']
  #allocation3 [shape = 'f32[1]{0:T(128)S(6)}', space=smem, size = 0x200, scoped, tag = 'scoped memory for tpu_custom_call.1']
  #allocation4 [shape = 'f32[1]{0:T(128)S(6)}', space=smem, size = 0x200, scoped, tag = 'scoped memory for tpu_custom_call.1']
  %s0 = inlined_call_operand.<no memory space> [shape: f32[1], index: 0, kind: input, shape index: {}]
  %s1 = inlined_call_operand.<no memory space> [shape: f32[1], index: 1, kind: input, shape index: {}]
  %s2 = inlined_call_operand.<no memory space> [shape: f32[1], index: 2, kind: input, shape index: {}]
  %s3 = inlined_call_operand.hbm [shape: f32[32,128], index: 3, kind: input, shape index: {}]
  %s4 = inlined_call_operand.hbm [shape: f32[32,128], index: 4, kind: output, shape index: {}]
  %s5 = sld [smem:[#allocation0]]
  $region53: #{tpu_custom_call.1} parent=0
    _
  %s7 = ssub.s32 1, %s5
  %s8 = scalar_select 0, %s7, %s5
  %9 = sst [smem:[#allocation2]] %s0
  %10 = sst [smem:[#allocation3]] %s1
  %11 = sst [smem:[#allocation4]] %s2
  $region1: #{tpu_custom_call.1} parent=0
    #allocation5 [shape = 'u8[16384]{0}', space=vmem, size = 0x4000, scoped, tag = 'input window, operand 3']
    #allocation6 [shape = 's32[2]{0}', space=sflag, size = 0x8, scoped, tag = 'scoped memory for tpu_custom_call.1']
    #allocation7 [shape = 's32[2]{0}', space=sflag, size = 0x8, scoped, tag = 'scoped memory for tpu_custom_call.1']
    #allocation8 [shape = 'u8[16384]{0}', space=vmem, size = 0x4000, scoped, tag = 'output window, operand 0']
    %12 = vsyncpa [#allocation6], 0
    %s13 = scalar_lea.sflag [#allocation6], 1
    %14 = vsyncpa %s13, 0
    %15 = vsyncpa [#allocation7], 0
    %s16 = scalar_lea.sflag [#allocation7], 1
    %17 = vsyncpa %s16, 0
    loop: start=0, step=1, limit=4
    $region2: #{tpu_custom_call.1} parent=1 // loop_pre_header
      _
    $region3: #{tpu_custom_call.1} parent=1 // loop_header
      %s19 = sphi 0, %s23
      %p20 = scmp.ge.s32.totalorder %s19, 4
      %s27 = sphi 0, %s27
      %s29 = sphi 0, %s27
      %s30 = sphi 0, %s29
      %s44 = sphi 0, %s30
      %s48 = sphi 0, %s48
      %s50 = sphi 0, %s48
      %s51 = sphi 0, %s50
      %s65 = sphi 0, %s51
      %s69 = sphi 0, %s69
      %s71 = sphi 0, %s69
      %s72 = sphi 0, %s71
      %s86 = sphi 0, %s72
      %s92 = sphi 0, %s94
      %s95 = sphi 0, %s92
      %s96 = sphi 0, %s95
      %s112 = sphi 0, %s96
      %s118 = sphi 0, %s120
      %s121 = sphi 0, %s118
      %s122 = sphi 0, %s121
      %s138 = sphi 0, %s122
    $region4: #{tpu_custom_call.1} parent=1 // loop_header_branch
      %22 = sbr.rel (%p20) target = $region8
    $region5: #{tpu_custom_call.1} parent=1 // loop_body
      %s24 = ssub.s32 %s19, 1
      %s25 = ssub.s32 %s19, 2
      %s26 = sadd.s32 %s19, 1
      %s28 = sadd.s32 %s27, 1
      %p31 = scmp.eq.s32.totalorder %s19, 1
      %p32 = scmp.ne.s32.totalorder %s27, %s29
      %p33 = scmp.eq.s32.totalorder %s19, 0
      %p34 = por %p32, %p33
      %p35 = scmp.ne.s32.totalorder %s27, %s29
      %p36 = scmp.eq.s32.totalorder %s24, 1
      %p37 = por %p35, %p36
      %p38 = scmp.ne.s32.totalorder %s29, %s30
      %p39 = scmp.eq.s32.totalorder %s24, 0
      %p40 = por %p38, %p39
      %p41 = scmp.ne.s32.totalorder %s29, %s30
      %p42 = scmp.eq.s32.totalorder %s25, 1
      %p43 = por %p41, %p42
      %p45 = scmp.ne.s32.totalorder %s30, %s44
      %p46 = scmp.eq.s32.totalorder %s25, 0
      %p47 = por %p45, %p46
      %s49 = sadd.s32 %s48, 1
      %p52 = scmp.eq.s32.totalorder %s19, 1
      %p53 = scmp.ne.s32.totalorder %s48, %s50
      %p54 = scmp.eq.s32.totalorder %s19, 0
      %p55 = por %p53, %p54
      %p56 = scmp.ne.s32.totalorder %s48, %s50
      %p57 = scmp.eq.s32.totalorder %s24, 1
      %p58 = por %p56, %p57
      %p59 = scmp.ne.s32.totalorder %s50, %s51
      %p60 = scmp.eq.s32.totalorder %s24, 0
      %p61 = por %p59, %p60
      %p62 = scmp.ne.s32.totalorder %s50, %s51
      %p63 = scmp.eq.s32.totalorder %s25, 1
      %p64 = por %p62, %p63
      %p66 = scmp.ne.s32.totalorder %s51, %s65
      %p67 = scmp.eq.s32.totalorder %s25, 0
      %p68 = por %p66, %p67
      %s70 = sadd.s32 %s69, 1
      %p73 = scmp.eq.s32.totalorder %s19, 1
      %p74 = scmp.ne.s32.totalorder %s69, %s71
      %p75 = scmp.eq.s32.totalorder %s19, 0
      %p76 = por %p74, %p75
      %p77 = scmp.ne.s32.totalorder %s69, %s71
      %p78 = scmp.eq.s32.totalorder %s24, 1
      %p79 = por %p77, %p78
      %p80 = scmp.ne.s32.totalorder %s71, %s72
      %p81 = scmp.eq.s32.totalorder %s24, 0
      %p82 = por %p80, %p81
      %p83 = scmp.ne.s32.totalorder %s71, %s72
      %p84 = scmp.eq.s32.totalorder %s25, 1
      %p85 = por %p83, %p84
      %p87 = scmp.ne.s32.totalorder %s72, %s86
      %p88 = scmp.eq.s32.totalorder %s25, 0
      %p89 = por %p87, %p88
      %s90 = ssub.s32 %s19, %s26
      %p91 = scmp.eq.s32.totalorder %s90, 0
      %s93 = sadd.s32 %s92, 1
      %s94 = scalar_select %p91, %s92, %s93
      %p97 = pneg %p91
      %p98 = scmp.eq.s32.totalorder %s19, 1
      %p99 = por %p97, %p98
      %p100 = scmp.ne.s32.totalorder %s92, %s95
      %p101 = scmp.eq.s32.totalorder %s19, 0
      %p102 = por %p100, %p101
      %p103 = scmp.ne.s32.totalorder %s92, %s95
      %p104 = scmp.eq.s32.totalorder %s24, 1
      %p105 = por %p103, %p104
      %p106 = scmp.ne.s32.totalorder %s95, %s96
      %p107 = scmp.eq.s32.totalorder %s24, 0
      %p108 = por %p106, %p107
      %p109 = scmp.ne.s32.totalorder %s95, %s96
      %p110 = scmp.eq.s32.totalorder %s25, 1
      %p111 = por %p109, %p110
      %p113 = scmp.ne.s32.totalorder %s96, %s112
      %p114 = scmp.eq.s32.totalorder %s25, 0
      %p115 = por %p113, %p114
      %s116 = ssub.s32 %s19, %s26
      %p117 = scmp.eq.s32.totalorder %s116, 0
      %s119 = sadd.s32 %s118, 1
      %s120 = scalar_select %p117, %s118, %s119
      %p123 = pneg %p117
      %p124 = scmp.eq.s32.totalorder %s19, 1
      %p125 = por %p123, %p124
      %p126 = scmp.ne.s32.totalorder %s118, %s121
      %p127 = scmp.eq.s32.totalorder %s19, 0
      %p128 = por %p126, %p127
      %p129 = scmp.ne.s32.totalorder %s118, %s121
      %p130 = scmp.eq.s32.totalorder %s24, 1
      %p131 = por %p129, %p130
      %p132 = scmp.ne.s32.totalorder %s121, %s122
      %p133 = scmp.eq.s32.totalorder %s24, 0
      %p134 = por %p132, %p133
      %p135 = scmp.ne.s32.totalorder %s121, %s122
      %p136 = scmp.eq.s32.totalorder %s25, 1
      %p137 = por %p135, %p136
      %p139 = scmp.ne.s32.totalorder %s122, %s138
      %p140 = scmp.eq.s32.totalorder %s25, 0
      %p141 = por %p139, %p140
      %p142 = scmp.le.s32.totalorder 1, %s19
      %p143 = scmp.lt.s32.totalorder %s19, 3
      %p144 = pnand %p142, %p143
      %p145 = pneg %p144
      // Predicated region
      $region9: #{tpu_custom_call.1} parent=5 // pred_check
        _
      $region10: #{tpu_custom_call.1} parent=5 // pred_check_branch
        %147 = sbr.rel (%p144) target = $region12
      $region11: #{tpu_custom_call.1} parent=5 // pred_region
        %s148 = ssub.s32 %s19, 1
        // Predicated region
        $region13: #{tpu_custom_call.1} parent=11 // pred_check
          %p149 = pneg %p40
        $region14: #{tpu_custom_call.1} parent=11 // pred_check_branch
          %151 = sbr.rel (%p149) target = $region16
        $region15: #{tpu_custom_call.1} parent=11 // pred_region
          _
        $region16: #{tpu_custom_call.1} parent=11 // pred_fallthru
          _
        // Predicated region
        $region17: #{tpu_custom_call.1} parent=11 // pred_check
          %p152 = pneg %p61
        $region18: #{tpu_custom_call.1} parent=11 // pred_check_branch
          %154 = sbr.rel (%p152) target = $region20
        $region19: #{tpu_custom_call.1} parent=11 // pred_region
          _
        $region20: #{tpu_custom_call.1} parent=11 // pred_fallthru
          _
        // Predicated region
        $region21: #{tpu_custom_call.1} parent=11 // pred_check
          %p155 = pneg %p82
        $region22: #{tpu_custom_call.1} parent=11 // pred_check_branch
          %157 = sbr.rel (%p155) target = $region24
        $region23: #{tpu_custom_call.1} parent=11 // pred_region
          _
        $region24: #{tpu_custom_call.1} parent=11 // pred_fallthru
          _
      $region12: #{tpu_custom_call.1} parent=5 // pred_fallthru
        _
      %p158 = scmp.lt.s32.totalorder %s19, 2
      // Predicated region
      $region25: #{tpu_custom_call.1} parent=5 // pred_check
        %p159 = pneg %p158
      $region26: #{tpu_custom_call.1} parent=5 // pred_check_branch
        %161 = sbr.rel (%p159) target = $region28
      $region27: #{tpu_custom_call.1} parent=5 // pred_region
        // Predicated region
        $region29: #{tpu_custom_call.1} parent=27 // pred_check
          %p162 = pneg %p102
        $region30: #{tpu_custom_call.1} parent=27 // pred_check_branch
          %164 = sbr.rel (%p162) target = $region32
        $region31: #{tpu_custom_call.1} parent=27 // pred_region
          %s165 = sand.u32 %s92, 1
          %s166 = scalar_lea.sflag [#allocation6], %s165
          %s167 = sand.u32 %s92, 1
          %s168 = smul.addr %s167, 16
          %s169 = scalar_lea.vmem [#allocation5], %s168
          %s170 = smul.u32 2, %s19
          %s172 = ssub.s32 256, 256
          %173 = vsyncadd %s166, %s172
          %s174 = smul.addr %s170, 128
          %s175 = scalar_lea.hbm %s3, %s174
          %s176 = sshll.u32 %s169, 4
          %s177 = int_to_ptr.vmem [resolvable:$true] %s176
          %182 = dma.hbm_to_vmem [thread:$0]  %s175, 256, %s177, %s166, 128, 128, 8
        $region32: #{tpu_custom_call.1} parent=27 // pred_fallthru
          _
      $region28: #{tpu_custom_call.1} parent=5 // pred_fallthru
        _
      %p183 = scmp.le.s32.totalorder 1, %s19
      %p184 = scmp.lt.s32.totalorder %s19, 3
      %p185 = pnand %p183, %p184
      %p186 = pneg %p185
      // Predicated region
      $region33: #{tpu_custom_call.1} parent=5 // pred_check
        _
      $region34: #{tpu_custom_call.1} parent=5 // pred_check_branch
        %188 = sbr.rel (%p185) target = $region36
      $region35: #{tpu_custom_call.1} parent=5 // pred_region
        %s189 = ssub.s32 %s19, 1
        %s190 = sand.u32 %s95, 1
        %s191 = scalar_lea.sflag [#allocation6], %s190
        %s192 = sand.u32 %s95, 1
        %s193 = smul.addr %s192, 16
        %s194 = scalar_lea.vmem [#allocation5], %s193
        // Predicated region
        $region37: #{tpu_custom_call.1} parent=35 // pred_check
          %p195 = pneg %p108
        $region38: #{tpu_custom_call.1} parent=35 // pred_check_branch
          %197 = sbr.rel (%p195) target = $region40
        $region39: #{tpu_custom_call.1} parent=35 // pred_region
          %198 = dma.done %s191, 256
        $region40: #{tpu_custom_call.1} parent=35 // pred_fallthru
          _
        %p199 = pneg %p40
        %p200 = pneg %p37
        %p201 = pneg %p61
        %p202 = pneg %p58
        %p203 = pneg %p82
        %p204 = pneg %p79
        %s205 = sand.u32 %s95, 1
        %s206 = scalar_lea.sflag [#allocation6], %s205
        %s207 = sand.u32 %s95, 1
        %s208 = smul.addr %s207, 16
        %s209 = scalar_lea.vmem [#allocation5], %s208
        %p210 = pneg %p108
        %p211 = pneg %p105
        %p212 = pneg %p134
        %p213 = pneg %p131
        %s214 = sand.u32 %s121, 1
        %s215 = scalar_lea.sflag [#allocation7], %s214
        %s216 = sand.u32 %s121, 1
        %s217 = smul.addr %s216, 16
        %s218 = scalar_lea.vmem [#allocation8], %s217
        %s219 = smul.u32 2, %s24
        %s220 = smul.u32 2, %s24
        %v221 = vld [vmem:[%s194] sm:$0xff]
        %v222 = vld [vmem:[%s194 + $0x8] sm:$0xff]
        %s223 = sld [smem:[#allocation2]]
        %v224 = vstv %s223
        %v225 = vsub.f32 %v221, %v224
        %v226 = vsub.f32 %v222, %v224
        %s227 = sld [smem:[#allocation3]]
        %v228 = vstv %s227
        %v229 = vmul.f32 %v225, %v228
        %v230 = vmul.f32 %v226, %v228
        %s231 = sld [smem:[#allocation4]]
        %v232 = vmul.f32 %v229, %v229
        %v233 = vmul.f32 %v230, %v230
        %v234 = vstv %s231
        %v235 = vsub.f32 %v234, %v232
        %v236 = vsub.f32 %v234, %v233
        %237 = vst [vmem:[%s218] sm:$0xff] %v235
        %238 = vst [vmem:[%s218 + $0x8] sm:$0xff] %v236
        %s239 = sand.u32 %s121, 1
        %s240 = scalar_lea.sflag [#allocation7], %s239
        %s241 = sand.u32 %s121, 1
        %s242 = smul.addr %s241, 16
        %s243 = scalar_lea.vmem [#allocation8], %s242
        // Predicated region
        $region41: #{tpu_custom_call.1} parent=35 // pred_check
          %p244 = pneg %p131
        $region42: #{tpu_custom_call.1} parent=35 // pred_check_branch
          %246 = sbr.rel (%p244) target = $region44
        $region43: #{tpu_custom_call.1} parent=35 // pred_region
          %s247 = smul.u32 2, %s24
          %s249 = ssub.s32 256, 256
          %250 = vsyncadd %s240, %s249
          %s251 = smul.addr %s247, 128
          %s252 = scalar_lea.hbm %s4, %s251
          %s253 = sshll.u32 %s243, 4
          %s254 = int_to_ptr.vmem [resolvable:$true] %s253
          %259 = dma.vmem_to_hbm [thread:$0]  %s254, 256, %s252, %s240, 128, 128, 8
        $region44: #{tpu_custom_call.1} parent=35 // pred_fallthru
          _
      $region36: #{tpu_custom_call.1} parent=5 // pred_fallthru
        _
      %p260 = scmp.le.s32.totalorder 2, %s19
      // Predicated region
      $region45: #{tpu_custom_call.1} parent=5 // pred_check
        %p261 = pneg %p260
      $region46: #{tpu_custom_call.1} parent=5 // pred_check_branch
        %263 = sbr.rel (%p261) target = $region48
      $region47: #{tpu_custom_call.1} parent=5 // pred_region
        %s264 = ssub.s32 %s19, 2
        // Predicated region
        $region49: #{tpu_custom_call.1} parent=47 // pred_check
          %p265 = pneg %p137
        $region50: #{tpu_custom_call.1} parent=47 // pred_check_branch
          %267 = sbr.rel (%p265) target = $region52
        $region51: #{tpu_custom_call.1} parent=47 // pred_region
          %s268 = sand.u32 %s122, 1
          %s269 = scalar_lea.sflag [#allocation7], %s268
          %s270 = sand.u32 %s122, 1
          %s271 = smul.addr %s270, 16
          %s272 = scalar_lea.vmem [#allocation8], %s271
          %273 = dma.done %s269, 256
        $region52: #{tpu_custom_call.1} parent=47 // pred_fallthru
          _
      $region48: #{tpu_custom_call.1} parent=5 // pred_fallthru
        _
    $region6: #{tpu_custom_call.1} parent=1 // loop_footer
      %s23 = sadd.s32 1, %s19
    $region7: #{tpu_custom_call.1} parent=1 // loop_footer_branch
      %18 = sbr.rel target = $region3
    $region8: #{tpu_custom_call.1} parent=1 // loop_exit
      _
    %274 = vsyncpa [#allocation6], 1
    %s275 = scalar_lea.sflag [#allocation6], 1
    %276 = vsyncpa %s275, 1
    %277 = vsyncpa [#allocation7], 1
    %s278 = scalar_lea.sflag [#allocation7], 1
    %279 = vsyncpa %s278, 1

</llo_original>
